<compile_context>
chip_gen: v5e
topology: v5e:2x2
jax: 0.10.0
libtpu: 0.0.40
codegen_flags: <defaults>
</compile_context>

<pallas_src>
import jax
import jax.numpy as jnp
from jax.experimental import pallas as pl
from jax.experimental.pallas import tpu as pltpu


# --------------------------------------------------------------------------- #
# Kernel
# --------------------------------------------------------------------------- #
def residual_kernel(x_ref, w1_ref, b1_ref, w2_ref, b2_ref, o_ref):
    x = x_ref[...]                                    # (tm, D) f32 or bf16
    x_f32 = x.astype(jnp.float32)
    # lin1: bf16 MXU inputs, f32 accumulate; bias + relu in f32 on the VPU.
    h = jnp.dot(x.astype(jnp.bfloat16), w1_ref[...].astype(jnp.bfloat16),
                preferred_element_type=jnp.float32) + b1_ref[...]
    h = jnp.maximum(h, 0.0)
    # lin2 + bias + relu.
    y = jnp.dot(h.astype(jnp.bfloat16), w2_ref[...].astype(jnp.bfloat16),
                preferred_element_type=jnp.float32) + b2_ref[...]
    y = jnp.maximum(y, 0.0)
    # Residual add in f32 against the original x.
    o_ref[...] = (y + x_f32).astype(o_ref.dtype)


# --------------------------------------------------------------------------- #
# Tiling helpers
# --------------------------------------------------------------------------- #
def _round_up(n, m):
    return ((n + m - 1) // m) * m


def _pick_tile(B, D, itemsize, *, target_bytes=2 << 20, min_tm=8, max_tm=4096):
    """Row tile sized by bytes (~2 MiB of x per DMA), capped so large batches
    get >= 4 grid steps (2 per v7x TensorCore) without shrinking below 128
    rows; tiny batches run as a single padded tile."""
    tm_bytes = (target_bytes // (D * itemsize)) // min_tm * min_tm
    tm_bytes = max(min_tm, min(max_tm, tm_bytes))
    tm_split = max(128, _round_up(pl.cdiv(B, 4), min_tm))
    tm = min(tm_bytes, tm_split)
    tm = min(tm, _round_up(B, min_tm))          # tiny B: one (padded) step
    return tm


# --------------------------------------------------------------------------- #
# Wrapper (padded, lane-aligned shapes)
# --------------------------------------------------------------------------- #
def residual_layer(x, w1_t, b1, w2_t, b2, *, tm=None, alias_x_out=False):
    """x: (B, D) f32 or bf16, D % 128 == 0.
    w*_t: (D, D) pre-transposed weights (bf16 recommended).  b*: (1, D) f32.
    Returns (B, D) in x.dtype."""
    B, D = x.shape
    assert D % 128 == 0, "pad the feature dim to a multiple of 128 host-side"
    assert w1_t.shape == (D, D) and w2_t.shape == (D, D)
    assert b1.shape == (1, D) and b2.shape == (1, D)

    if tm is None:
        tm = _pick_tile(B, D, x.dtype.itemsize)
    B_pad = _round_up(B, tm)
    x_in = x if B_pad == B else jnp.zeros((B_pad, D), x.dtype).at[:B].set(x)
    grid = (B_pad // tm,)

    w_item = w1_t.dtype.itemsize
    cost = pl.CostEstimate(
        flops=4 * B_pad * D * D,                       # two D×D matmuls per row
        transcendentals=0,
        bytes_accessed=(2 * D * D * w_item + 2 * D * 4
                        + 2 * B_pad * D * x.dtype.itemsize),
    )

    def call(single_buffer_weights):
        # Weights / biases never change block index -> single buffer suffices.
        const_kw = dict(pipeline_mode=pl.Buffered(1)) if single_buffer_weights else {}
        in_specs = [
            pl.BlockSpec((tm, D), lambda i: (i, 0)),                 # x tile
            pl.BlockSpec((D, D), lambda i: (0, 0), **const_kw),      # W1^T resident
            pl.BlockSpec((1, D), lambda i: (0, 0), **const_kw),      # b1
            pl.BlockSpec((D, D), lambda i: (0, 0), **const_kw),      # W2^T resident
            pl.BlockSpec((1, D), lambda i: (0, 0), **const_kw),      # b2
        ]
        out_spec = pl.BlockSpec((tm, D), lambda i: (i, 0))

        # VMEM budget: resident weights (+biases), double-buffered x/out tiles,
        # in-kernel temporaries (x bf16, h f32, h bf16, y f32 + slack).
        wbuf = 1 if single_buffer_weights else 2
        w_bytes = wbuf * (2 * D * D * w_item + 2 * D * 4)
        io_bytes = 2 * tm * D * x.dtype.itemsize * 2   # in + out, double-buffered
        tmp_bytes = 5 * tm * D * 4
        budget = int(1.3 * (w_bytes + io_bytes + tmp_bytes))
        cp_kwargs = dict(dimension_semantics=("parallel",))
        if budget > (16 << 20):          # exceeds v5e's scoped default
            cp_kwargs["vmem_limit_bytes"] = min(max(budget, 32 << 20), 112 << 20)

        extra = {"input_output_aliases": {0: 0}} if alias_x_out else {}

        return pl.pallas_call(
            residual_kernel,
            out_shape=jax.ShapeDtypeStruct((B_pad, D), x.dtype),
            grid_spec=pl.GridSpec(grid=grid, in_specs=in_specs, out_specs=out_spec),
            cost_estimate=cost,
            compiler_params=pltpu.CompilerParams(**cp_kwargs),
            **extra,
        )(x_in, w1_t, b1, w2_t, b2)

    try:
        out = call(single_buffer_weights=True)
    except Exception:
        # Some jax builds reject pipeline_mode=pl.Buffered(1); retry with the
        # default double-buffered weight blocks (a few extra KiB of VMEM).
        out = call(single_buffer_weights=False)

    return out if B_pad == B else out[:B]


# --------------------------------------------------------------------------- #
# PyTorch-layout convenience: pad D -> multiple of 128, transpose weights.
# (In production, do this parameter conversion once, not per call.)
# --------------------------------------------------------------------------- #
def pad_torch_linear(w, b, d_pad, weight_dtype=jnp.bfloat16):
    """nn.Linear weight (out, in) + bias (out,) -> zero-padded transposed
    (d_pad, d_pad) weight and (1, d_pad) bias.  Zero padding of BOTH the
    weight rows/cols and the bias lanes makes padded lanes compute exactly 0
    through both relus, so the residual path is preserved."""
    out_dim, in_dim = w.shape
    w_t = jnp.zeros((d_pad, d_pad), weight_dtype).at[:in_dim, :out_dim].set(
        w.T.astype(weight_dtype))
    b_p = jnp.zeros((1, d_pad), jnp.float32).at[0, :out_dim].set(
        b.astype(jnp.float32))
    return w_t, b_p


def residual_layer_from_torch_params(x, w1, b1, w2, b2, **kw):
    B, D_real = x.shape
    D = _round_up(max(D_real, 128), 128)
    w1_t, b1p = pad_torch_linear(w1, b1, D)
    w2_t, b2p = pad_torch_linear(w2, b2, D)
    x_pad = jnp.zeros((B, D), x.dtype).at[:, :D_real].set(x)
    out = residual_layer(x_pad, w1_t, b1p, w2_t, b2p, **kw)
    return out[:, :D_real]


# --------------------------------------------------------------------------- #
# References
# --------------------------------------------------------------------------- #
def reference_f32(x, w1, b1, w2, b2):
    h = jnp.maximum(x @ w1.T + b1, 0.0)
    y = jnp.maximum(h @ w2.T + b2, 0.0)
    return y + x


if __name__ == "__main__":
    # Module default: in_dim = out_dim = 100 (residual requires them equal).
    # Deliberately awkward small batch (B=10) to exercise the B-padding path.
    B, D_feat = 10, 100
    key = jax.random.PRNGKey(0)
    kx, kw1, kb1, kw2, kb2 = jax.random.split(key, 5)

    x = jax.random.normal(kx, (B, D_feat), dtype=jnp.float32)

    # nn.Linear-style uniform(-1/sqrt(fan_in), 1/sqrt(fan_in)) init, PyTorch
    # layout: weight (out, in), bias (out,).
    bound = float(D_feat) ** -0.5
    w1 = jax.random.uniform(kw1, (D_feat, D_feat), jnp.float32, -bound, bound)
    b1 = jax.random.uniform(kb1, (D_feat,), jnp.float32, -bound, bound)
    w2 = jax.random.uniform(kw2, (D_feat, D_feat), jnp.float32, -bound, bound)
    b2 = jax.random.uniform(kb2, (D_feat,), jnp.float32, -bound, bound)

    ref = reference_f32(x, w1, b1, w2, b2)

    # f32 activations at the boundary (closest to the PyTorch forward).
    out = residual_layer_from_torch_params(x, w1, b1, w2, b2)
    out = jax.block_until_ready(out)
    assert out.shape == (B, D_feat)
    assert jnp.allclose(out, ref, atol=5e-2, rtol=5e-2), "f32-IO mismatch vs reference"

    # bf16 activations at the boundary: halves the dominant x/out HBM traffic
    # on this mem-bound kernel; matmul inputs were bf16 already.
    out_bf = residual_layer_from_torch_params(x.astype(jnp.bfloat16), w1, b1, w2, b2)
    out_bf = jax.block_until_ready(out_bf)
    assert out_bf.dtype == jnp.bfloat16
    assert jnp.allclose(out_bf.astype(jnp.float32), ref, atol=1e-1, rtol=1e-1), \
        "bf16-IO mismatch vs reference"

    print("KERNEL_OK")
</pallas_src>

<mosaic_0001>
module attributes {stable_mosaic.version = 11 : i64} {
  func.func @residual_kernel(%arg0: i32, %arg1: memref<16x128xf32, #tpu.memory_space<vmem>>, %arg2: memref<128x128xbf16, #tpu.memory_space<vmem>>, %arg3: memref<1x128xf32, #tpu.memory_space<vmem>>, %arg4: memref<128x128xbf16, #tpu.memory_space<vmem>>, %arg5: memref<1x128xf32, #tpu.memory_space<vmem>>, %arg6: memref<16x128xf32, #tpu.memory_space<vmem>>) attributes {dimension_semantics = [#tpu.dimension_semantics<parallel>], iteration_bounds = array<i64: 1>, scalar_prefetch = 0 : i64, scratch_operands = 0 : i64, tpu.core_type = #tpu.core_type<tc>, window_params = [{transform_indices = @transform_0, window_bounds = array<i64: 16, 128>}, {pipeline_mode = #tpu.pipeline_mode<synchronous>, transform_indices = @transform_1, window_bounds = array<i64: 128, 128>}, {pipeline_mode = #tpu.pipeline_mode<synchronous>, transform_indices = @transform_2, window_bounds = array<i64: 1, 128>}, {pipeline_mode = #tpu.pipeline_mode<synchronous>, transform_indices = @transform_3, window_bounds = array<i64: 128, 128>}, {pipeline_mode = #tpu.pipeline_mode<synchronous>, transform_indices = @transform_4, window_bounds = array<i64: 1, 128>}, {transform_indices = @transform_5, window_bounds = array<i64: 16, 128>}]} {
    %c0 = arith.constant 0 : index
    %c0_0 = arith.constant 0 : index
    %0 = vector.load %arg1[%c0, %c0_0] : memref<16x128xf32, #tpu.memory_space<vmem>>, vector<16x128xf32>
    %1 = arith.truncf %0 : vector<16x128xf32> to vector<16x128xbf16>
    %c0_1 = arith.constant 0 : index
    %c0_2 = arith.constant 0 : index
    %2 = vector.load %arg2[%c0_1, %c0_2] : memref<128x128xbf16, #tpu.memory_space<vmem>>, vector<128x128xbf16>
    %cst = arith.constant dense<0.000000e+00> : vector<16x128xf32>
    %3 = tpu.matmul %1, %2, %cst {dimension_numbers = #tpu.dot_dimension_numbers<[1], [0], [0], [1], [0, 0, 1, 1], [], []>} : vector<16x128xbf16>, vector<128x128xbf16>, vector<16x128xf32> -> vector<16x128xf32>
    %c0_3 = arith.constant 0 : index
    %c0_4 = arith.constant 0 : index
    %4 = vector.load %arg3[%c0_3, %c0_4] : memref<1x128xf32, #tpu.memory_space<vmem>>, vector<1x128xf32>
    %5 = vector.broadcast %4 : vector<1x128xf32> to vector<16x128xf32>
    %6 = arith.addf %3, %5 : vector<16x128xf32>
    %cst_5 = arith.constant 0.000000e+00 : f32
    %7 = vector.broadcast %cst_5 : f32 to vector<16x128xf32>
    %8 = arith.maximumf %6, %7 : vector<16x128xf32>
    %9 = arith.truncf %8 : vector<16x128xf32> to vector<16x128xbf16>
    %c0_6 = arith.constant 0 : index
    %c0_7 = arith.constant 0 : index
    %10 = vector.load %arg4[%c0_6, %c0_7] : memref<128x128xbf16, #tpu.memory_space<vmem>>, vector<128x128xbf16>
    %cst_8 = arith.constant dense<0.000000e+00> : vector<16x128xf32>
    %11 = tpu.matmul %9, %10, %cst_8 {dimension_numbers = #tpu.dot_dimension_numbers<[1], [0], [0], [1], [0, 0, 1, 1], [], []>} : vector<16x128xbf16>, vector<128x128xbf16>, vector<16x128xf32> -> vector<16x128xf32>
    %c0_9 = arith.constant 0 : index
    %c0_10 = arith.constant 0 : index
    %12 = vector.load %arg5[%c0_9, %c0_10] : memref<1x128xf32, #tpu.memory_space<vmem>>, vector<1x128xf32>
    %13 = vector.broadcast %12 : vector<1x128xf32> to vector<16x128xf32>
    %14 = arith.addf %11, %13 : vector<16x128xf32>
    %cst_11 = arith.constant 0.000000e+00 : f32
    %15 = vector.broadcast %cst_11 : f32 to vector<16x128xf32>
    %16 = arith.maximumf %14, %15 : vector<16x128xf32>
    %17 = arith.addf %16, %0 : vector<16x128xf32>
    %c0_12 = arith.constant 0 : index
    %c0_13 = arith.constant 0 : index
    %18 = vector.load %arg6[%c0_12, %c0_13] : memref<16x128xf32, #tpu.memory_space<vmem>>, vector<16x128xf32>
    tpu.vector_store %arg6[%c0_12, %c0_13], %17 {strides = array<i32>} : memref<16x128xf32, #tpu.memory_space<vmem>>, vector<16x128xf32>,
    return
  }
  func.func @transform_0(%arg0: i32) -> (i32, i32) {
    %c0_i32 = arith.constant 0 : i32
    %c0_i32_0 = arith.constant 0 : i32
    return %arg0, %c0_i32 : i32, i32
  }
  func.func @transform_1(%arg0: i32) -> (i32, i32) {
    %c0_i32 = arith.constant 0 : i32
    %c0_i32_0 = arith.constant 0 : i32
    %c0_i32_1 = arith.constant 0 : i32
    return %c0_i32, %c0_i32_0 : i32, i32
  }
  func.func @transform_2(%arg0: i32) -> (i32, i32) {
    %c0_i32 = arith.constant 0 : i32
    %c0_i32_0 = arith.constant 0 : i32
    %c0_i32_1 = arith.constant 0 : i32
    return %c0_i32, %c0_i32_0 : i32, i32
  }
  func.func @transform_3(%arg0: i32) -> (i32, i32) {
    %c0_i32 = arith.constant 0 : i32
    %c0_i32_0 = arith.constant 0 : i32
    %c0_i32_1 = arith.constant 0 : i32
    return %c0_i32, %c0_i32_0 : i32, i32
  }
  func.func @transform_4(%arg0: i32) -> (i32, i32) {
    %c0_i32 = arith.constant 0 : i32
    %c0_i32_0 = arith.constant 0 : i32
    %c0_i32_1 = arith.constant 0 : i32
    return %c0_i32, %c0_i32_0 : i32, i32
  }
  func.func @transform_5(%arg0: i32) -> (i32, i32) {
    %c0_i32 = arith.constant 0 : i32
    %c0_i32_0 = arith.constant 0 : i32
    return %arg0, %c0_i32 : i32, i32
  }
}

module attributes {stable_mosaic.version = 11 : i64} {
  func.func @residual_kernel(%arg0: i32, %arg1: memref<16x128xf32, #tpu.memory_space<vmem>>, %arg2: memref<128x128xbf16, #tpu.memory_space<vmem>>, %arg3: memref<1x128xf32, #tpu.memory_space<vmem>>, %arg4: memref<128x128xbf16, #tpu.memory_space<vmem>>, %arg5: memref<1x128xf32, #tpu.memory_space<vmem>>, %arg6: memref<16x128xf32, #tpu.memory_space<vmem>>) attributes {dimension_semantics = [#tpu.dimension_semantics<parallel>], iteration_bounds = array<i64: 1>, scalar_prefetch = 0 : i64, scratch_operands = 0 : i64, tpu.core_type = #tpu.core_type<tc>, window_params = [{transform_indices = @transform_0, window_bounds = array<i64: 16, 128>}, {pipeline_mode = #tpu.pipeline_mode<synchronous>, transform_indices = @transform_1, window_bounds = array<i64: 128, 128>}, {pipeline_mode = #tpu.pipeline_mode<synchronous>, transform_indices = @transform_2, window_bounds = array<i64: 1, 128>}, {pipeline_mode = #tpu.pipeline_mode<synchronous>, transform_indices = @transform_3, window_bounds = array<i64: 128, 128>}, {pipeline_mode = #tpu.pipeline_mode<synchronous>, transform_indices = @transform_4, window_bounds = array<i64: 1, 128>}, {transform_indices = @transform_5, window_bounds = array<i64: 16, 128>}]} {
    %c0 = arith.constant 0 : index
    %c0_0 = arith.constant 0 : index
    %0 = vector.load %arg1[%c0, %c0_0] : memref<16x128xf32, #tpu.memory_space<vmem>>, vector<16x128xf32>
    %1 = arith.truncf %0 : vector<16x128xf32> to vector<16x128xbf16>
    %c0_1 = arith.constant 0 : index
    %c0_2 = arith.constant 0 : index
    %2 = vector.load %arg2[%c0_1, %c0_2] : memref<128x128xbf16, #tpu.memory_space<vmem>>, vector<128x128xbf16>
    %cst = arith.constant dense<0.000000e+00> : vector<16x128xf32>
    %3 = tpu.matmul %1, %2, %cst {dimension_numbers = #tpu.dot_dimension_numbers<[1], [0], [0], [1], [0, 0, 1, 1], [], []>} : vector<16x128xbf16>, vector<128x128xbf16>, vector<16x128xf32> -> vector<16x128xf32>
    %c0_3 = arith.constant 0 : index
    %c0_4 = arith.constant 0 : index
    %4 = vector.load %arg3[%c0_3, %c0_4] : memref<1x128xf32, #tpu.memory_space<vmem>>, vector<1x128xf32>
    %5 = vector.broadcast %4 : vector<1x128xf32> to vector<16x128xf32>
    %6 = arith.addf %3, %5 : vector<16x128xf32>
    %cst_5 = arith.constant 0.000000e+00 : f32
    %7 = vector.broadcast %cst_5 : f32 to vector<16x128xf32>
    %8 = arith.maximumf %6, %7 : vector<16x128xf32>
    %9 = arith.truncf %8 : vector<16x128xf32> to vector<16x128xbf16>
    %c0_6 = arith.constant 0 : index
    %c0_7 = arith.constant 0 : index
    %10 = vector.load %arg4[%c0_6, %c0_7] : memref<128x128xbf16, #tpu.memory_space<vmem>>, vector<128x128xbf16>
    %cst_8 = arith.constant dense<0.000000e+00> : vector<16x128xf32>
    %11 = tpu.matmul %9, %10, %cst_8 {dimension_numbers = #tpu.dot_dimension_numbers<[1], [0], [0], [1], [0, 0, 1, 1], [], []>} : vector<16x128xbf16>, vector<128x128xbf16>, vector<16x128xf32> -> vector<16x128xf32>
    %c0_9 = arith.constant 0 : index
    %c0_10 = arith.constant 0 : index
    %12 = vector.load %arg5[%c0_9, %c0_10] : memref<1x128xf32, #tpu.memory_space<vmem>>, vector<1x128xf32>
    %13 = vector.broadcast %12 : vector<1x128xf32> to vector<16x128xf32>
    %14 = arith.addf %11, %13 : vector<16x128xf32>
    %cst_11 = arith.constant 0.000000e+00 : f32
    %15 = vector.broadcast %cst_11 : f32 to vector<16x128xf32>
    %16 = arith.maximumf %14, %15 : vector<16x128xf32>
    %17 = arith.addf %16, %0 : vector<16x128xf32>
    %c0_12 = arith.constant 0 : index
    %c0_13 = arith.constant 0 : index
    %18 = vector.load %arg6[%c0_12, %c0_13] : memref<16x128xf32, #tpu.memory_space<vmem>>, vector<16x128xf32>
    tpu.vector_store %arg6[%c0_12, %c0_13], %17 {strides = array<i32>} : memref<16x128xf32, #tpu.memory_space<vmem>>, vector<16x128xf32>,
    return
  }
  func.func @transform_0(%arg0: i32) -> (i32, i32) {
    %c0_i32 = arith.constant 0 : i32
    %c0_i32_0 = arith.constant 0 : i32
    return %arg0, %c0_i32 : i32, i32
  }
  func.func @transform_1(%arg0: i32) -> (i32, i32) {
    %c0_i32 = arith.constant 0 : i32
    %c0_i32_0 = arith.constant 0 : i32
    %c0_i32_1 = arith.constant 0 : i32
    return %c0_i32, %c0_i32_0 : i32, i32
  }
  func.func @transform_2(%arg0: i32) -> (i32, i32) {
    %c0_i32 = arith.constant 0 : i32
    %c0_i32_0 = arith.constant 0 : i32
    %c0_i32_1 = arith.constant 0 : i32
    return %c0_i32, %c0_i32_0 : i32, i32
  }
  func.func @transform_3(%arg0: i32) -> (i32, i32) {
    %c0_i32 = arith.constant 0 : i32
    %c0_i32_0 = arith.constant 0 : i32
    %c0_i32_1 = arith.constant 0 : i32
    return %c0_i32, %c0_i32_0 : i32, i32
  }
  func.func @transform_4(%arg0: i32) -> (i32, i32) {
    %c0_i32 = arith.constant 0 : i32
    %c0_i32_0 = arith.constant 0 : i32
    %c0_i32_1 = arith.constant 0 : i32
    return %c0_i32, %c0_i32_0 : i32, i32
  }
  func.func @transform_5(%arg0: i32) -> (i32, i32) {
    %c0_i32 = arith.constant 0 : i32
    %c0_i32_0 = arith.constant 0 : i32
    return %arg0, %c0_i32 : i32, i32
  }
}

</mosaic_0001>

<llo_original>
// kernel: tpu_custom_call.1
$region0: #{tpu_custom_call.1}
  #allocation0 [shape = 'u32[]', space=smem, size = 0x4, offset = 0x4, fixed_abs, tag = 'smem constant byte address 0x4 - core index']
  #allocation1 [shape = 'u32[72,128]{1,0:T(1,128)}', space=vmem, size = 0x9000, scoped, tag = 'internal scratch']
  %s0 = inlined_call_operand.hbm [shape: f32[16,128], index: 0, kind: input, shape index: {}]
  %s1 = inlined_call_operand.hbm [shape: bf16[128,128], index: 1, kind: input, shape index: {}]
  %s2 = inlined_call_operand.vmem [shape: f32[1,128], index: 2, kind: input, shape index: {}]
  %s3 = inlined_call_operand.hbm [shape: bf16[128,128], index: 3, kind: input, shape index: {}]
  %s4 = inlined_call_operand.vmem [shape: f32[1,128], index: 4, kind: input, shape index: {}]
  %s5 = inlined_call_operand.hbm [shape: f32[16,128], index: 5, kind: output, shape index: {}]
  %s6 = sld [smem:[#allocation0]]
  $region42: #{tpu_custom_call.1} parent=0
    _
  %s8 = ssub.s32 1, %s6
  %s9 = scalar_select 0, %s8, %s6
  $region1: #{tpu_custom_call.1} parent=0
    #allocation2 [shape = 'u8[8192]{0}', space=vmem, size = 0x2000, scoped, tag = 'input window, operand 0, single buffered']
    #allocation3 [shape = 's32[1]{0}', space=sflag, size = 0x4, scoped, tag = 'scoped memory for tpu_custom_call.1']
    #allocation4 [shape = 's32[1]{0}', space=sflag, size = 0x4, scoped, tag = 'scoped memory for tpu_custom_call.1']
    #allocation5 [shape = 'u8[32768]{0}', space=vmem, size = 0x8000, scoped, tag = 'input window, operand 1, single buffered']
    #allocation6 [shape = 's32[1]{0}', space=sflag, size = 0x4, scoped, tag = 'scoped memory for tpu_custom_call.1']
    #allocation7 [shape = 'u8[32768]{0}', space=vmem, size = 0x8000, scoped, tag = 'input window, operand 3, single buffered']
    #allocation8 [shape = 'u8[8192]{0}', space=vmem, size = 0x2000, scoped, tag = 'output window, operand 0, single buffered']
    %10 = vsyncpa [#allocation3], 0
    %11 = vsyncpa [#allocation6], 0
    %12 = vsyncpa [#allocation4], 0
    // Predicated region
    $region2: #{tpu_custom_call.1} parent=1 // pred_check
      _
    $region3: #{tpu_custom_call.1} parent=1 // pred_check_branch
      %14 = sbr.rel (0) target = $region5
    $region4: #{tpu_custom_call.1} parent=1 // pred_region
      %16 = vsyncadd [#allocation3], 0
      %s17 = sshll.u32 %s0, 4
      %s18 = int_to_ptr.hbm [resolvable:$true] %s17
      %s19 = sshll.u32 [#allocation2], 4
      %s20 = int_to_ptr.vmem [resolvable:$true] %s19
      %25 = dma.hbm_to_vmem [thread:$0]  %s18, 256, %s20, [#allocation3], 128, 128, 8
    $region5: #{tpu_custom_call.1} parent=1 // pred_fallthru
      _
    // Predicated region
    $region6: #{tpu_custom_call.1} parent=1 // pred_check
      _
    $region7: #{tpu_custom_call.1} parent=1 // pred_check_branch
      %27 = sbr.rel (0) target = $region9
    $region8: #{tpu_custom_call.1} parent=1 // pred_region
      %29 = vsyncadd [#allocation6], 0
      %s30 = sshll.u32 %s1, 4
      %s31 = int_to_ptr.hbm [resolvable:$true] %s30
      %s32 = sshll.u32 [#allocation5], 4
      %s33 = int_to_ptr.vmem [resolvable:$true] %s32
      %38 = dma.hbm_to_vmem [thread:$0]  %s31, 1024, %s33, [#allocation6], 64, 64, 4
    $region9: #{tpu_custom_call.1} parent=1 // pred_fallthru
      _
    // Predicated region
    $region10: #{tpu_custom_call.1} parent=1 // pred_check
      _
    $region11: #{tpu_custom_call.1} parent=1 // pred_check_branch
      %40 = sbr.rel (0) target = $region13
    $region12: #{tpu_custom_call.1} parent=1 // pred_region
      _
    $region13: #{tpu_custom_call.1} parent=1 // pred_fallthru
      _
    // Predicated region
    $region14: #{tpu_custom_call.1} parent=1 // pred_check
      _
    $region15: #{tpu_custom_call.1} parent=1 // pred_check_branch
      %42 = sbr.rel (0) target = $region17
    $region16: #{tpu_custom_call.1} parent=1 // pred_region
      %44 = vsyncadd [#allocation6], 0
      %s45 = sshll.u32 %s3, 4
      %s46 = int_to_ptr.hbm [resolvable:$true] %s45
      %s47 = sshll.u32 [#allocation7], 4
      %s48 = int_to_ptr.vmem [resolvable:$true] %s47
      %53 = dma.hbm_to_vmem [thread:$0]  %s46, 1024, %s48, [#allocation6], 64, 64, 4
    $region17: #{tpu_custom_call.1} parent=1 // pred_fallthru
      _
    // Predicated region
    $region18: #{tpu_custom_call.1} parent=1 // pred_check
      _
    $region19: #{tpu_custom_call.1} parent=1 // pred_check_branch
      %55 = sbr.rel (0) target = $region21
    $region20: #{tpu_custom_call.1} parent=1 // pred_region
      _
    $region21: #{tpu_custom_call.1} parent=1 // pred_fallthru
      _
    // Predicated region
    $region22: #{tpu_custom_call.1} parent=1 // pred_check
      _
    $region23: #{tpu_custom_call.1} parent=1 // pred_check_branch
      %57 = sbr.rel (0) target = $region25
    $region24: #{tpu_custom_call.1} parent=1 // pred_region
      %59 = dma.done [#allocation3], 256
    $region25: #{tpu_custom_call.1} parent=1 // pred_fallthru
      _
    // Predicated region
    $region26: #{tpu_custom_call.1} parent=1 // pred_check
      _
    $region27: #{tpu_custom_call.1} parent=1 // pred_check_branch
      %61 = sbr.rel (0) target = $region29
    $region28: #{tpu_custom_call.1} parent=1 // pred_region
      %63 = dma.done [#allocation6], 1024
    $region29: #{tpu_custom_call.1} parent=1 // pred_fallthru
      _
    // Predicated region
    $region30: #{tpu_custom_call.1} parent=1 // pred_check
      _
    $region31: #{tpu_custom_call.1} parent=1 // pred_check_branch
      %65 = sbr.rel (0) target = $region33
    $region32: #{tpu_custom_call.1} parent=1 // pred_region
      %67 = dma.done [#allocation6], 1024
    $region33: #{tpu_custom_call.1} parent=1 // pred_fallthru
      _
    %v68 = vld [vmem:[#allocation2] sm:$0xff]
    %v69 = vld [vmem:[#allocation2 + $0x8] sm:$0xff]
    %v70 = vpack.c.bf16 %v69, %v68
    %v71 = vld [vmem:[#allocation5] sm:$0xf]
    %v72 = vld [vmem:[#allocation5 + $0x4] sm:$0xf]
    %v73 = vld [vmem:[#allocation5 + $0x8] sm:$0xf]
    %v74 = vld [vmem:[#allocation5 + $0xc] sm:$0xf]
    %v75 = vld [vmem:[#allocation5 + $0x10] sm:$0xf]
    %v76 = vld [vmem:[#allocation5 + $0x14] sm:$0xf]
    %v77 = vld [vmem:[#allocation5 + $0x18] sm:$0xf]
    %v78 = vld [vmem:[#allocation5 + $0x1c] sm:$0xf]
    %v79 = vld [vmem:[#allocation5 + $0x20] sm:$0xf]
    %v80 = vld [vmem:[#allocation5 + $0x24] sm:$0xf]
    %v81 = vld [vmem:[#allocation5 + $0x28] sm:$0xf]
    %v82 = vld [vmem:[#allocation5 + $0x2c] sm:$0xf]
    %v83 = vld [vmem:[#allocation5 + $0x30] sm:$0xf]
    %v84 = vld [vmem:[#allocation5 + $0x34] sm:$0xf]
    %v85 = vld [vmem:[#allocation5 + $0x38] sm:$0xf]
    %v86 = vld [vmem:[#allocation5 + $0x3c] sm:$0xf]
    %v87 = vld [vmem:[%s2] sm:$0x1]
    %v89 = vperm.slane %v87, 0
    %v107 = vunpack.c.l.b16 %v71
    %v108 = vunpack.c.l.b16 %v72
    %v109 = vunpack.c.l.b16 %v73
    %v110 = vunpack.c.l.b16 %v74
    %v111 = vunpack.c.l.b16 %v75
    %v112 = vunpack.c.l.b16 %v76
    %v113 = vunpack.c.l.b16 %v77
    %v114 = vunpack.c.l.b16 %v78
    %v115 = vunpack.c.l.b16 %v79
    %v116 = vunpack.c.l.b16 %v80
    %v117 = vunpack.c.l.b16 %v81
    %v118 = vunpack.c.l.b16 %v82
    %v119 = vunpack.c.l.b16 %v83
    %v120 = vunpack.c.l.b16 %v84
    %v121 = vunpack.c.l.b16 %v85
    %v122 = vunpack.c.l.b16 %v86
    %v123 = vpack.c.b16 %v108, %v107
    %v124 = vpack.c.b16 %v110, %v109
    %v125 = vpack.c.b16 %v112, %v111
    %v126 = vpack.c.b16 %v114, %v113
    %v127 = vpack.c.b16 %v116, %v115
    %v128 = vpack.c.b16 %v118, %v117
    %v129 = vpack.c.b16 %v120, %v119
    %v130 = vpack.c.b16 %v122, %v121
    %139 = vmatpush.bf16.msra.mxu0 %v130
    %140 = vmatpush.bf16.msra.mxu0 %v129
    %141 = vmatpush.bf16.msra.mxu0 %v128
    %142 = vmatpush.bf16.msra.mxu0 %v127
    %143 = vmatpush.bf16.msra.mxu0 %v126
    %144 = vmatpush.bf16.msra.mxu0 %v125
    %145 = vmatpush.bf16.msra.mxu0 %v124
    %146 = vmatpush.bf16.msra.mxu0 %v123
    %147 = vmatmul.bf16.gmra.mxu0 %v70
    %v148 = vpop.f32.mrf.mxu0
    %v149 = vadd.f32 %v89, %v148
    %v150 = vpop.f32.mrf.mxu0
    %v151 = vadd.f32 %v89, %v150
    %152 = vdwg.mxu0
    %v153 = vmax.f32 %v149, 0.0
    %v154 = vmax.f32 %v151, 0.0
    %v155 = vpack.c.bf16 %v154, %v153
    %v156 = vld [vmem:[#allocation7] sm:$0xf]
    %v157 = vld [vmem:[#allocation7 + $0x4] sm:$0xf]
    %v158 = vld [vmem:[#allocation7 + $0x8] sm:$0xf]
    %v159 = vld [vmem:[#allocation7 + $0xc] sm:$0xf]
    %v160 = vld [vmem:[#allocation7 + $0x10] sm:$0xf]
    %v161 = vld [vmem:[#allocation7 + $0x14] sm:$0xf]
    %v162 = vld [vmem:[#allocation7 + $0x18] sm:$0xf]
    %v163 = vld [vmem:[#allocation7 + $0x1c] sm:$0xf]
    %v164 = vld [vmem:[#allocation7 + $0x20] sm:$0xf]
    %v165 = vld [vmem:[#allocation7 + $0x24] sm:$0xf]
    %v166 = vld [vmem:[#allocation7 + $0x28] sm:$0xf]
    %v167 = vld [vmem:[#allocation7 + $0x2c] sm:$0xf]
    %v168 = vld [vmem:[#allocation7 + $0x30] sm:$0xf]
    %v169 = vld [vmem:[#allocation7 + $0x34] sm:$0xf]
    %v170 = vld [vmem:[#allocation7 + $0x38] sm:$0xf]
    %v171 = vld [vmem:[#allocation7 + $0x3c] sm:$0xf]
    %v172 = vld [vmem:[%s4] sm:$0x1]
    %v174 = vperm.slane %v172, 0
    %v192 = vunpack.c.l.b16 %v156
    %v193 = vunpack.c.l.b16 %v157
    %v194 = vunpack.c.l.b16 %v158
    %v195 = vunpack.c.l.b16 %v159
    %v196 = vunpack.c.l.b16 %v160
    %v197 = vunpack.c.l.b16 %v161
    %v198 = vunpack.c.l.b16 %v162
    %v199 = vunpack.c.l.b16 %v163
    %v200 = vunpack.c.l.b16 %v164
    %v201 = vunpack.c.l.b16 %v165
    %v202 = vunpack.c.l.b16 %v166
    %v203 = vunpack.c.l.b16 %v167
    %v204 = vunpack.c.l.b16 %v168
    %v205 = vunpack.c.l.b16 %v169
    %v206 = vunpack.c.l.b16 %v170
    %v207 = vunpack.c.l.b16 %v171
    %v208 = vpack.c.b16 %v193, %v192
    %v209 = vpack.c.b16 %v195, %v194
    %v210 = vpack.c.b16 %v197, %v196
    %v211 = vpack.c.b16 %v199, %v198
    %v212 = vpack.c.b16 %v201, %v200
    %v213 = vpack.c.b16 %v203, %v202
    %v214 = vpack.c.b16 %v205, %v204
    %v215 = vpack.c.b16 %v207, %v206
    %224 = vmatpush.bf16.msra.mxu0 %v215
    %225 = vmatpush.bf16.msra.mxu0 %v214
    %226 = vmatpush.bf16.msra.mxu0 %v213
    %227 = vmatpush.bf16.msra.mxu0 %v212
    %228 = vmatpush.bf16.msra.mxu0 %v211
    %229 = vmatpush.bf16.msra.mxu0 %v210
    %230 = vmatpush.bf16.msra.mxu0 %v209
    %231 = vmatpush.bf16.msra.mxu0 %v208
    %232 = vmatmul.bf16.gmra.mxu0 %v155
    %v233 = vpop.f32.mrf.mxu0
    %v234 = vadd.f32 %v174, %v233
    %v235 = vpop.f32.mrf.mxu0
    %v236 = vadd.f32 %v174, %v235
    %237 = vdwg.mxu0
    %v238 = vmax.f32 %v234, 0.0
    %v239 = vmax.f32 %v236, 0.0
    %v240 = vadd.f32 %v238, %v68
    %v241 = vadd.f32 %v239, %v69
    %242 = vst [vmem:[#allocation8] sm:$0xff] %v240
    %243 = vst [vmem:[#allocation8 + $0x8] sm:$0xff] %v241
    // Predicated region
    $region34: #{tpu_custom_call.1} parent=1 // pred_check
      _
    $region35: #{tpu_custom_call.1} parent=1 // pred_check_branch
      %245 = sbr.rel (0) target = $region37
    $region36: #{tpu_custom_call.1} parent=1 // pred_region
      %247 = vsyncadd [#allocation4], 0
      %s248 = sshll.u32 [#allocation8], 4
      %s249 = int_to_ptr.vmem [resolvable:$true] %s248
      %s250 = sshll.u32 %s5, 4
      %s251 = int_to_ptr.hbm [resolvable:$true] %s250
      %256 = dma.vmem_to_hbm [thread:$0]  %s249, 256, %s251, [#allocation4], 128, 128, 8
    $region37: #{tpu_custom_call.1} parent=1 // pred_fallthru
      _
    // Predicated region
    $region38: #{tpu_custom_call.1} parent=1 // pred_check
      _
    $region39: #{tpu_custom_call.1} parent=1 // pred_check_branch
      %258 = sbr.rel (0) target = $region41
    $region40: #{tpu_custom_call.1} parent=1 // pred_region
      %260 = dma.done [#allocation4], 256
    $region41: #{tpu_custom_call.1} parent=1 // pred_fallthru
      _
    %261 = vsyncpa [#allocation3], 1
    %262 = vsyncpa [#allocation6], 1
    %263 = vsyncpa [#allocation4], 1

// kernel: tpu_custom_call.1
$region0: #{tpu_custom_call.1}
  #allocation0 [shape = 'u32[]', space=smem, size = 0x4, offset = 0x4, fixed_abs, tag = 'smem constant byte address 0x4 - core index']
  #allocation1 [shape = 'u32[72,128]{1,0:T(1,128)}', space=vmem, size = 0x9000, scoped, tag = 'internal scratch']
  %s0 = inlined_call_operand.hbm [shape: f32[16,128], index: 0, kind: input, shape index: {}]
  %s1 = inlined_call_operand.hbm [shape: bf16[128,128], index: 1, kind: input, shape index: {}]
  %s2 = inlined_call_operand.vmem [shape: f32[1,128], index: 2, kind: input, shape index: {}]
  %s3 = inlined_call_operand.hbm [shape: bf16[128,128], index: 3, kind: input, shape index: {}]
  %s4 = inlined_call_operand.vmem [shape: f32[1,128], index: 4, kind: input, shape index: {}]
  %s5 = inlined_call_operand.hbm [shape: f32[16,128], index: 5, kind: output, shape index: {}]
  %s6 = sld [smem:[#allocation0]]
  $region42: #{tpu_custom_call.1} parent=0
    _
  %s8 = ssub.s32 1, %s6
  %s9 = scalar_select 0, %s8, %s6
  $region1: #{tpu_custom_call.1} parent=0
    #allocation2 [shape = 'u8[8192]{0}', space=vmem, size = 0x2000, scoped, tag = 'input window, operand 0, single buffered']
    #allocation3 [shape = 's32[1]{0}', space=sflag, size = 0x4, scoped, tag = 'scoped memory for tpu_custom_call.1']
    #allocation4 [shape = 's32[1]{0}', space=sflag, size = 0x4, scoped, tag = 'scoped memory for tpu_custom_call.1']
    #allocation5 [shape = 'u8[32768]{0}', space=vmem, size = 0x8000, scoped, tag = 'input window, operand 1, single buffered']
    #allocation6 [shape = 's32[1]{0}', space=sflag, size = 0x4, scoped, tag = 'scoped memory for tpu_custom_call.1']
    #allocation7 [shape = 'u8[32768]{0}', space=vmem, size = 0x8000, scoped, tag = 'input window, operand 3, single buffered']
    #allocation8 [shape = 'u8[8192]{0}', space=vmem, size = 0x2000, scoped, tag = 'output window, operand 0, single buffered']
    %10 = vsyncpa [#allocation3], 0
    %11 = vsyncpa [#allocation6], 0
    %12 = vsyncpa [#allocation4], 0
    // Predicated region
    $region2: #{tpu_custom_call.1} parent=1 // pred_check
      _
    $region3: #{tpu_custom_call.1} parent=1 // pred_check_branch
      %14 = sbr.rel (0) target = $region5
    $region4: #{tpu_custom_call.1} parent=1 // pred_region
      %16 = vsyncadd [#allocation3], 0
      %s17 = sshll.u32 %s0, 4
      %s18 = int_to_ptr.hbm [resolvable:$true] %s17
      %s19 = sshll.u32 [#allocation2], 4
      %s20 = int_to_ptr.vmem [resolvable:$true] %s19
      %25 = dma.hbm_to_vmem [thread:$0]  %s18, 256, %s20, [#allocation3], 128, 128, 8
    $region5: #{tpu_custom_call.1} parent=1 // pred_fallthru
      _
    // Predicated region
    $region6: #{tpu_custom_call.1} parent=1 // pred_check
      _
    $region7: #{tpu_custom_call.1} parent=1 // pred_check_branch
      %27 = sbr.rel (0) target = $region9
    $region8: #{tpu_custom_call.1} parent=1 // pred_region
      %29 = vsyncadd [#allocation6], 0
      %s30 = sshll.u32 %s1, 4
      %s31 = int_to_ptr.hbm [resolvable:$true] %s30
      %s32 = sshll.u32 [#allocation5], 4
      %s33 = int_to_ptr.vmem [resolvable:$true] %s32
      %38 = dma.hbm_to_vmem [thread:$0]  %s31, 1024, %s33, [#allocation6], 64, 64, 4
    $region9: #{tpu_custom_call.1} parent=1 // pred_fallthru
      _
    // Predicated region
    $region10: #{tpu_custom_call.1} parent=1 // pred_check
      _
    $region11: #{tpu_custom_call.1} parent=1 // pred_check_branch
      %40 = sbr.rel (0) target = $region13
    $region12: #{tpu_custom_call.1} parent=1 // pred_region
      _
    $region13: #{tpu_custom_call.1} parent=1 // pred_fallthru
      _
    // Predicated region
    $region14: #{tpu_custom_call.1} parent=1 // pred_check
      _
    $region15: #{tpu_custom_call.1} parent=1 // pred_check_branch
      %42 = sbr.rel (0) target = $region17
    $region16: #{tpu_custom_call.1} parent=1 // pred_region
      %44 = vsyncadd [#allocation6], 0
      %s45 = sshll.u32 %s3, 4
      %s46 = int_to_ptr.hbm [resolvable:$true] %s45
      %s47 = sshll.u32 [#allocation7], 4
      %s48 = int_to_ptr.vmem [resolvable:$true] %s47
      %53 = dma.hbm_to_vmem [thread:$0]  %s46, 1024, %s48, [#allocation6], 64, 64, 4
    $region17: #{tpu_custom_call.1} parent=1 // pred_fallthru
      _
    // Predicated region
    $region18: #{tpu_custom_call.1} parent=1 // pred_check
      _
    $region19: #{tpu_custom_call.1} parent=1 // pred_check_branch
      %55 = sbr.rel (0) target = $region21
    $region20: #{tpu_custom_call.1} parent=1 // pred_region
      _
    $region21: #{tpu_custom_call.1} parent=1 // pred_fallthru
      _
    // Predicated region
    $region22: #{tpu_custom_call.1} parent=1 // pred_check
      _
    $region23: #{tpu_custom_call.1} parent=1 // pred_check_branch
      %57 = sbr.rel (0) target = $region25
    $region24: #{tpu_custom_call.1} parent=1 // pred_region
      %59 = dma.done [#allocation3], 256
    $region25: #{tpu_custom_call.1} parent=1 // pred_fallthru
      _
    // Predicated region
    $region26: #{tpu_custom_call.1} parent=1 // pred_check
      _
    $region27: #{tpu_custom_call.1} parent=1 // pred_check_branch
      %61 = sbr.rel (0) target = $region29
    $region28: #{tpu_custom_call.1} parent=1 // pred_region
      %63 = dma.done [#allocation6], 1024
    $region29: #{tpu_custom_call.1} parent=1 // pred_fallthru
      _
    // Predicated region
    $region30: #{tpu_custom_call.1} parent=1 // pred_check
      _
    $region31: #{tpu_custom_call.1} parent=1 // pred_check_branch
      %65 = sbr.rel (0) target = $region33
    $region32: #{tpu_custom_call.1} parent=1 // pred_region
      %67 = dma.done [#allocation6], 1024
    $region33: #{tpu_custom_call.1} parent=1 // pred_fallthru
      _
    %v68 = vld [vmem:[#allocation2] sm:$0xff]
    %v69 = vld [vmem:[#allocation2 + $0x8] sm:$0xff]
    %v70 = vpack.c.bf16 %v69, %v68
    %v71 = vld [vmem:[#allocation5] sm:$0xf]
    %v72 = vld [vmem:[#allocation5 + $0x4] sm:$0xf]
    %v73 = vld [vmem:[#allocation5 + $0x8] sm:$0xf]
    %v74 = vld [vmem:[#allocation5 + $0xc] sm:$0xf]
    %v75 = vld [vmem:[#allocation5 + $0x10] sm:$0xf]
    %v76 = vld [vmem:[#allocation5 + $0x14] sm:$0xf]
    %v77 = vld [vmem:[#allocation5 + $0x18] sm:$0xf]
    %v78 = vld [vmem:[#allocation5 + $0x1c] sm:$0xf]
    %v79 = vld [vmem:[#allocation5 + $0x20] sm:$0xf]
    %v80 = vld [vmem:[#allocation5 + $0x24] sm:$0xf]
    %v81 = vld [vmem:[#allocation5 + $0x28] sm:$0xf]
    %v82 = vld [vmem:[#allocation5 + $0x2c] sm:$0xf]
    %v83 = vld [vmem:[#allocation5 + $0x30] sm:$0xf]
    %v84 = vld [vmem:[#allocation5 + $0x34] sm:$0xf]
    %v85 = vld [vmem:[#allocation5 + $0x38] sm:$0xf]
    %v86 = vld [vmem:[#allocation5 + $0x3c] sm:$0xf]
    %v87 = vld [vmem:[%s2] sm:$0x1]
    %v89 = vperm.slane %v87, 0
    %v107 = vunpack.c.l.b16 %v71
    %v108 = vunpack.c.l.b16 %v72
    %v109 = vunpack.c.l.b16 %v73
    %v110 = vunpack.c.l.b16 %v74
    %v111 = vunpack.c.l.b16 %v75
    %v112 = vunpack.c.l.b16 %v76
    %v113 = vunpack.c.l.b16 %v77
    %v114 = vunpack.c.l.b16 %v78
    %v115 = vunpack.c.l.b16 %v79
    %v116 = vunpack.c.l.b16 %v80
    %v117 = vunpack.c.l.b16 %v81
    %v118 = vunpack.c.l.b16 %v82
    %v119 = vunpack.c.l.b16 %v83
    %v120 = vunpack.c.l.b16 %v84
    %v121 = vunpack.c.l.b16 %v85
    %v122 = vunpack.c.l.b16 %v86
    %v123 = vpack.c.b16 %v108, %v107
    %v124 = vpack.c.b16 %v110, %v109
    %v125 = vpack.c.b16 %v112, %v111
    %v126 = vpack.c.b16 %v114, %v113
    %v127 = vpack.c.b16 %v116, %v115
    %v128 = vpack.c.b16 %v118, %v117
    %v129 = vpack.c.b16 %v120, %v119
    %v130 = vpack.c.b16 %v122, %v121
    %139 = vmatpush.bf16.msra.mxu0 %v130
    %140 = vmatpush.bf16.msra.mxu0 %v129
    %141 = vmatpush.bf16.msra.mxu0 %v128
    %142 = vmatpush.bf16.msra.mxu0 %v127
    %143 = vmatpush.bf16.msra.mxu0 %v126
    %144 = vmatpush.bf16.msra.mxu0 %v125
    %145 = vmatpush.bf16.msra.mxu0 %v124
    %146 = vmatpush.bf16.msra.mxu0 %v123
    %147 = vmatmul.bf16.gmra.mxu0 %v70
    %v148 = vpop.f32.mrf.mxu0
    %v149 = vadd.f32 %v89, %v148
    %v150 = vpop.f32.mrf.mxu0
    %v151 = vadd.f32 %v89, %v150
    %152 = vdwg.mxu0
    %v153 = vmax.f32 %v149, 0.0
    %v154 = vmax.f32 %v151, 0.0
    %v155 = vpack.c.bf16 %v154, %v153
    %v156 = vld [vmem:[#allocation7] sm:$0xf]
    %v157 = vld [vmem:[#allocation7 + $0x4] sm:$0xf]
    %v158 = vld [vmem:[#allocation7 + $0x8] sm:$0xf]
    %v159 = vld [vmem:[#allocation7 + $0xc] sm:$0xf]
    %v160 = vld [vmem:[#allocation7 + $0x10] sm:$0xf]
    %v161 = vld [vmem:[#allocation7 + $0x14] sm:$0xf]
    %v162 = vld [vmem:[#allocation7 + $0x18] sm:$0xf]
    %v163 = vld [vmem:[#allocation7 + $0x1c] sm:$0xf]
    %v164 = vld [vmem:[#allocation7 + $0x20] sm:$0xf]
    %v165 = vld [vmem:[#allocation7 + $0x24] sm:$0xf]
    %v166 = vld [vmem:[#allocation7 + $0x28] sm:$0xf]
    %v167 = vld [vmem:[#allocation7 + $0x2c] sm:$0xf]
    %v168 = vld [vmem:[#allocation7 + $0x30] sm:$0xf]
    %v169 = vld [vmem:[#allocation7 + $0x34] sm:$0xf]
    %v170 = vld [vmem:[#allocation7 + $0x38] sm:$0xf]
    %v171 = vld [vmem:[#allocation7 + $0x3c] sm:$0xf]
    %v172 = vld [vmem:[%s4] sm:$0x1]
    %v174 = vperm.slane %v172, 0
    %v192 = vunpack.c.l.b16 %v156
    %v193 = vunpack.c.l.b16 %v157
    %v194 = vunpack.c.l.b16 %v158
    %v195 = vunpack.c.l.b16 %v159
    %v196 = vunpack.c.l.b16 %v160
    %v197 = vunpack.c.l.b16 %v161
    %v198 = vunpack.c.l.b16 %v162
    %v199 = vunpack.c.l.b16 %v163
    %v200 = vunpack.c.l.b16 %v164
    %v201 = vunpack.c.l.b16 %v165
    %v202 = vunpack.c.l.b16 %v166
    %v203 = vunpack.c.l.b16 %v167
    %v204 = vunpack.c.l.b16 %v168
    %v205 = vunpack.c.l.b16 %v169
    %v206 = vunpack.c.l.b16 %v170
    %v207 = vunpack.c.l.b16 %v171
    %v208 = vpack.c.b16 %v193, %v192
    %v209 = vpack.c.b16 %v195, %v194
    %v210 = vpack.c.b16 %v197, %v196
    %v211 = vpack.c.b16 %v199, %v198
    %v212 = vpack.c.b16 %v201, %v200
    %v213 = vpack.c.b16 %v203, %v202
    %v214 = vpack.c.b16 %v205, %v204
    %v215 = vpack.c.b16 %v207, %v206
    %224 = vmatpush.bf16.msra.mxu0 %v215
    %225 = vmatpush.bf16.msra.mxu0 %v214
    %226 = vmatpush.bf16.msra.mxu0 %v213
    %227 = vmatpush.bf16.msra.mxu0 %v212
    %228 = vmatpush.bf16.msra.mxu0 %v211
    %229 = vmatpush.bf16.msra.mxu0 %v210
    %230 = vmatpush.bf16.msra.mxu0 %v209
    %231 = vmatpush.bf16.msra.mxu0 %v208
    %232 = vmatmul.bf16.gmra.mxu0 %v155
    %v233 = vpop.f32.mrf.mxu0
    %v234 = vadd.f32 %v174, %v233
    %v235 = vpop.f32.mrf.mxu0
    %v236 = vadd.f32 %v174, %v235
    %237 = vdwg.mxu0
    %v238 = vmax.f32 %v234, 0.0
    %v239 = vmax.f32 %v236, 0.0
    %v240 = vadd.f32 %v238, %v68
    %v241 = vadd.f32 %v239, %v69
    %242 = vst [vmem:[#allocation8] sm:$0xff] %v240
    %243 = vst [vmem:[#allocation8 + $0x8] sm:$0xff] %v241
    // Predicated region
    $region34: #{tpu_custom_call.1} parent=1 // pred_check
      _
    $region35: #{tpu_custom_call.1} parent=1 // pred_check_branch
      %245 = sbr.rel (0) target = $region37
    $region36: #{tpu_custom_call.1} parent=1 // pred_region
      %247 = vsyncadd [#allocation4], 0
      %s248 = sshll.u32 [#allocation8], 4
      %s249 = int_to_ptr.vmem [resolvable:$true] %s248
      %s250 = sshll.u32 %s5, 4
      %s251 = int_to_ptr.hbm [resolvable:$true] %s250
      %256 = dma.vmem_to_hbm [thread:$0]  %s249, 256, %s251, [#allocation4], 128, 128, 8
    $region37: #{tpu_custom_call.1} parent=1 // pred_fallthru
      _
    // Predicated region
    $region38: #{tpu_custom_call.1} parent=1 // pred_check
      _
    $region39: #{tpu_custom_call.1} parent=1 // pred_check_branch
      %258 = sbr.rel (0) target = $region41
    $region40: #{tpu_custom_call.1} parent=1 // pred_region
      %260 = dma.done [#allocation4], 256
    $region41: #{tpu_custom_call.1} parent=1 // pred_fallthru
      _
    %261 = vsyncpa [#allocation3], 1
    %262 = vsyncpa [#allocation6], 1
    %263 = vsyncpa [#allocation4], 1

</llo_original>
